<compile_context>
chip_gen: v7x
topology: tpu7x:2x2x1
jax: 0.10.0
libtpu: 0.0.40
codegen_flags: <defaults>
</compile_context>

<pallas_src>
import jax
import jax.numpy as jnp
from jax.experimental import pallas as pl
from jax.experimental.pallas import tpu as pltpu


def _gelu_new(x):
    # HF / Phi "gelu_new" (tanh approximation), computed in f32.
    c = 0.7978845608028654  # sqrt(2/pi)
    return 0.5 * x * (1.0 + jnp.tanh(c * (x + 0.044715 * x * x * x)))


def phi_mlp_kernel(x_ref, w1_ref, b1_ref, w2_ref, b2_ref, o_ref, acc_ref):
    k = pl.program_id(1)

    @pl.when(k == 0)
    def _init():
        # Seed the accumulator with the fc2 bias (f32 already) -> no epilogue add.
        acc_ref[...] = jnp.broadcast_to(b2_ref[...], acc_ref.shape)

    # fc1 partial: [tm, H] @ [H, ti] -> f32 on the MXU.
    h = jnp.dot(x_ref[...], w1_ref[...], preferred_element_type=jnp.float32)
    h = h + b1_ref[...]

    # Activation in f32 (VPU/EUP).
    a = _gelu_new(h)

    # fc2 partial: [tm, ti] @ [ti, H] accumulated into the f32 VMEM scratch.
    # Cast activation back to weight dtype so bf16 weights keep the fast MXU path.
    acc_ref[...] += jnp.dot(a.astype(w2_ref.dtype), w2_ref[...],
                            preferred_element_type=jnp.float32)

    @pl.when(k == pl.num_programs(1) - 1)
    def _store():
        o_ref[...] = acc_ref[...].astype(o_ref.dtype)


def _round_up(x, m):
    return ((x + m - 1) // m) * m


def _cdiv(a, b):
    return (a + b - 1) // b


def _detect_tpu():
    """Return (generation, vmem_capacity_bytes, tensorcores_per_chip)."""
    kind = ""
    try:
        kind = (jax.devices()[0].device_kind or "").lower()
    except Exception:
        pass
    if "v7" in kind:
        gen, vmem_cap, n_tc = "v7x", 64 << 20, 2
    elif "v6" in kind:
        gen, vmem_cap, n_tc = "v6e", 128 << 20, 1
    elif "v5" in kind:
        gen, vmem_cap, n_tc = "v5e", 128 << 20, 1
    else:
        gen, vmem_cap, n_tc = "unknown", 64 << 20, 1
    try:
        vmem_cap = int(pltpu.get_tpu_info().vmem_capacity_bytes)
    except Exception:
        pass  # keep the generation-based guess
    return gen, vmem_cap, n_tc


def phi_mlp(x, w1, b1, w2, b2, *, tm=None, ti=None):
    """x: [T, H], w1: [H, I], b1: [I], w2: [I, H], b2: [H] -> [T, H]."""
    T, H = x.shape
    I = w1.shape[1]

    gen, vmem_cap, n_tc = _detect_tpu()

    # Token tile: sized against each generation's compute/HBM balance point
    # (arithmetic intensity of this kernel ~= tm FLOP/byte since weights are
    # re-streamed per token tile):  v5e ~240, v7x ~311, v6e ~655 FLOP/byte.
    if tm is None:
        tm = {"v5e": 256, "v6e": 768, "v7x": 512}.get(gen, 256)
    # Intermediate tile: bigger on v6e (128 MiB VMEM) to halve k-step count.
    if ti is None:
        ti = 2048 if gen == "v6e" else 1024

    # v7x has two TensorCores: keep >= 2 blocks on the "parallel" token axis
    # for medium/large T so both cores get work.
    if n_tc >= 2 and T > 256:
        tm = min(tm, _round_up(_cdiv(T, n_tc), 256))

    tm = max(8, min(tm, _round_up(T, 8)))   # clamp for small T (decode / toys)

    # Intermediate-dim tile: full I when it fits, else a multiple of 128.
    # A non-divisible I is zero-padded below (no ragged/undefined reduction
    # block, no full-weight-resident VMEM cliff).
    if I <= ti:
        ti = I
    else:
        ti = max(128, (ti // 128) * 128)

    in_bytes = jnp.dtype(x.dtype).itemsize
    w_bytes = jnp.dtype(w1.dtype).itemsize

    def vmem_need(tm_, ti_):
        return (
            2 * tm_ * H * in_bytes            # x tiles (double-buffered)
            + 2 * H * ti_ * w_bytes           # fc1 weight tiles
            + 2 * 8 * ti_ * 4                 # fc1 bias tiles (f32, sublane pad)
            + 2 * ti_ * H * w_bytes           # fc2 weight tiles
            + 2 * 8 * H * 4                   # fc2 bias tiles (f32)
            + 2 * tm_ * H * in_bytes          # out tiles
            + tm_ * H * 4                     # f32 accumulator scratch
            + tm_ * ti_ * (4 + 4 + w_bytes)   # fc1 intermediate: h, gelu(h), cast
        )

    # Usable VMEM for this kernel: leave headroom (~8 MiB on 64 MiB v7x parts,
    # ~16 MiB on 128 MiB v5e/v6e parts).  No blanket 64 MiB cap anymore.
    usable = vmem_cap - max(8 << 20, vmem_cap // 8)

    # Shrink tiles if the full budget (incl. fc1 intermediate) doesn't fit.
    while vmem_need(tm, ti) > usable:
        if ti >= 512:
            ti = max(256, ((ti // 2) // 128) * 128)
        elif tm > 256:
            tm = max(256, _round_up(tm // 2, 8))
        else:
            break
    tm = max(8, min(tm, _round_up(T, 8)))

    # Zero-pad the intermediate dim so the reduction grid is exact.  Padded W1
    # columns / b1 entries give gelu_new(0)=0 and the padded W2 rows are zero,
    # so the extra k work contributes nothing.  (Phi-2's I=10240 divides the
    # default ti, so no padding in the common case.)
    if I % ti != 0:
        pad = _round_up(I, ti) - I
        w1 = jnp.pad(w1, ((0, 0), (0, pad)))
        b1 = jnp.pad(b1, (0, pad))
        w2 = jnp.pad(w2, ((0, pad), (0, 0)))
        I = I + pad

    # Biases as f32 rows (tiny) so the kernel does no per-step converts.
    b1r = b1.reshape(1, I).astype(jnp.float32)
    b2r = b2.reshape(1, H).astype(jnp.float32)

    n_tok_tiles = _cdiv(T, tm)
    grid = (n_tok_tiles, I // ti)

    need = vmem_need(tm, ti)
    vmem_limit = int(max(min(need + (4 << 20), usable), min(32 << 20, usable)))
    vmem_limit = min(vmem_limit, vmem_cap - (2 << 20))

    cost = pl.CostEstimate(
        flops=4 * T * H * I,            # two matmuls, 2*T*H*I each
        transcendentals=T * I,          # one tanh per intermediate element
        bytes_accessed=(
            2 * T * H * in_bytes                              # x read + out write
            + n_tok_tiles * ((w1.size + w2.size) * w_bytes    # weights re-streamed
                             + (b1r.size + b2r.size) * 4)     #   per token tile
        ),
    )

    # TODO(synk): decode (small T) is weight-bandwidth-bound; an int8
    # (v5e/v6e) / fp8 (v7x) weight-streaming path with per-channel scales
    # would roughly halve step time.
    return pl.pallas_call(
        phi_mlp_kernel,
        out_shape=jax.ShapeDtypeStruct((T, H), x.dtype),
        grid_spec=pltpu.PrefetchScalarGridSpec(
            num_scalar_prefetch=0,
            grid=grid,
            in_specs=[
                pl.BlockSpec((tm, H), lambda i, k: (i, 0)),   # x tile
                pl.BlockSpec((H, ti), lambda i, k: (0, k)),   # fc1 weight tile
                pl.BlockSpec((1, ti), lambda i, k: (0, k)),   # fc1 bias tile (f32)
                pl.BlockSpec((ti, H), lambda i, k: (k, 0)),   # fc2 weight tile
                pl.BlockSpec((1, H), lambda i, k: (0, 0)),    # fc2 bias (f32)
            ],
            out_specs=pl.BlockSpec((tm, H), lambda i, k: (i, 0)),
            scratch_shapes=[pltpu.VMEM((tm, H), jnp.float32)],
        ),
        compiler_params=pltpu.CompilerParams(
            dimension_semantics=("parallel", "arbitrary"),
            vmem_limit_bytes=vmem_limit,
        ),
        cost_estimate=cost,
    )(x, w1, b1r, w2, b2r)


if __name__ == "__main__":
    key = jax.random.PRNGKey(0)

    # --- Test 1: toy PhiMLP shapes (hidden=32, n_inner=4*hidden, 8 tokens). ---
    T, H = 8, 32
    I = 4 * H
    kx, k1, kb1, k2, kb2, key = jax.random.split(key, 6)
    x = jax.random.normal(kx, (T, H), dtype=jnp.float32)
    w1 = jax.random.normal(k1, (H, I), dtype=jnp.float32) * 0.05
    b1 = jax.random.normal(kb1, (I,), dtype=jnp.float32) * 0.05
    w2 = jax.random.normal(k2, (I, H), dtype=jnp.float32) * 0.05
    b2 = jax.random.normal(kb2, (H,), dtype=jnp.float32) * 0.05

    out = jax.block_until_ready(phi_mlp(x, w1, b1, w2, b2))
    ref = _gelu_new(x @ w1 + b1) @ w2 + b2
    assert jnp.allclose(out, ref, atol=1e-4, rtol=1e-4), "f32 mismatch (test 1)"

    # bf16 native-dtype MXU path, loose tolerance.
    xb, w1b, b1b = x.astype(jnp.bfloat16), w1.astype(jnp.bfloat16), b1.astype(jnp.bfloat16)
    w2b, b2b = w2.astype(jnp.bfloat16), b2.astype(jnp.bfloat16)
    out_b = jax.block_until_ready(phi_mlp(xb, w1b, b1b, w2b, b2b))
    ref_b = (_gelu_new(xb.astype(jnp.float32) @ w1b.astype(jnp.float32)
                       + b1b.astype(jnp.float32))
             @ w2b.astype(jnp.float32) + b2b.astype(jnp.float32))
    assert jnp.allclose(out_b.astype(jnp.float32), ref_b, atol=3e-2, rtol=5e-2), \
        "bf16 mismatch (test 1)"

    # --- Test 2: exercises the multi-step reduction, ragged token tile, and
    # the intermediate-dim zero-padding path (I=320 not a multiple of ti=128).
    T2, H2, I2 = 20, 128, 320
    kx, k1, kb1, k2, kb2, key = jax.random.split(key, 6)
    x2 = jax.random.normal(kx, (T2, H2), dtype=jnp.float32)
    w1_2 = jax.random.normal(k1, (H2, I2), dtype=jnp.float32) * 0.05
    b1_2 = jax.random.normal(kb1, (I2,), dtype=jnp.float32) * 0.05
    w2_2 = jax.random.normal(k2, (I2, H2), dtype=jnp.float32) * 0.05
    b2_2 = jax.random.normal(kb2, (H2,), dtype=jnp.float32) * 0.05

    out2 = jax.block_until_ready(phi_mlp(x2, w1_2, b1_2, w2_2, b2_2, ti=128))
    ref2 = _gelu_new(x2 @ w1_2 + b1_2) @ w2_2 + b2_2
    assert jnp.allclose(out2, ref2, atol=1e-4, rtol=1e-4), "f32 mismatch (test 2)"

    print("KERNEL_OK")
</pallas_src>

<mosaic_0001>
module attributes {stable_mosaic.version = 11 : i64} {
  func.func @phi_mlp_kernel(%arg0: i32, %arg1: i32, %arg2: memref<8x32xf32, #tpu.memory_space<vmem>>, %arg3: memref<32x128xf32, #tpu.memory_space<vmem>>, %arg4: memref<1x128xf32, #tpu.memory_space<vmem>>, %arg5: memref<128x32xf32, #tpu.memory_space<vmem>>, %arg6: memref<1x32xf32, #tpu.memory_space<vmem>>, %arg7: memref<8x32xf32, #tpu.memory_space<vmem>>, %arg8: memref<8x32xf32, #tpu.memory_space<vmem>>) attributes {dimension_semantics = [#tpu.dimension_semantics<parallel>, #tpu.dimension_semantics<arbitrary>], iteration_bounds = array<i64: 1, 1>, scalar_prefetch = 0 : i64, scratch_operands = 1 : i64, tpu.core_type = #tpu.core_type<tc>, window_params = [{transform_indices = @transform_0, window_bounds = array<i64: 8, 32>}, {transform_indices = @transform_1, window_bounds = array<i64: 32, 128>}, {transform_indices = @transform_2, window_bounds = array<i64: 1, 128>}, {transform_indices = @transform_3, window_bounds = array<i64: 128, 32>}, {pipeline_mode = #tpu.pipeline_mode<synchronous>, transform_indices = @transform_4, window_bounds = array<i64: 1, 32>}, {transform_indices = @transform_5, window_bounds = array<i64: 8, 32>}]} {
    %c0_i32 = arith.constant 0 : i32
    %0 = arith.cmpi eq, %arg1, %c0_i32 : i32
    %1 = arith.extui %0 : i1 to i32
    %c0_i32_0 = arith.constant 0 : i32
    %2 = arith.cmpi ne, %1, %c0_i32_0 : i32
    scf.if %2 {
      %c0_19 = arith.constant 0 : index
      %c0_20 = arith.constant 0 : index
      %30 = vector.load %arg6[%c0_19, %c0_20] : memref<1x32xf32, #tpu.memory_space<vmem>>, vector<1x32xf32>
      %31 = vector.shape_cast %30 : vector<1x32xf32> to vector<1x32xf32>
      %32 = vector.broadcast %31 : vector<1x32xf32> to vector<8x32xf32>
      %c0_21 = arith.constant 0 : index
      %c0_22 = arith.constant 0 : index
      %33 = vector.load %arg8[%c0_21, %c0_22] : memref<8x32xf32, #tpu.memory_space<vmem>>, vector<8x32xf32>
      tpu.vector_store %arg8[%c0_21, %c0_22], %32 {strides = array<i32>} : memref<8x32xf32, #tpu.memory_space<vmem>>, vector<8x32xf32>,
    } else {
    }
    %c0 = arith.constant 0 : index
    %c0_1 = arith.constant 0 : index
    %3 = vector.load %arg2[%c0, %c0_1] : memref<8x32xf32, #tpu.memory_space<vmem>>, vector<8x32xf32>
    %c0_2 = arith.constant 0 : index
    %c0_3 = arith.constant 0 : index
    %4 = vector.load %arg3[%c0_2, %c0_3] : memref<32x128xf32, #tpu.memory_space<vmem>>, vector<32x128xf32>
    %cst = arith.constant dense<0.000000e+00> : vector<8x128xf32>
    %5 = tpu.matmul %3, %4, %cst {dimension_numbers = #tpu.dot_dimension_numbers<[1], [0], [0], [1], [0, 0, 1, 1], [], []>} : vector<8x32xf32>, vector<32x128xf32>, vector<8x128xf32> -> vector<8x128xf32>
    %c0_4 = arith.constant 0 : index
    %c0_5 = arith.constant 0 : index
    %6 = vector.load %arg4[%c0_4, %c0_5] : memref<1x128xf32, #tpu.memory_space<vmem>>, vector<1x128xf32>
    %7 = vector.broadcast %6 : vector<1x128xf32> to vector<8x128xf32>
    %8 = arith.addf %5, %7 : vector<8x128xf32>
    %cst_6 = arith.constant 5.000000e-01 : f32
    %9 = vector.broadcast %cst_6 : f32 to vector<8x128xf32>
    %10 = arith.mulf %9, %8 : vector<8x128xf32>
    %cst_7 = arith.constant 4.471500e-02 : f32
    %11 = vector.broadcast %cst_7 : f32 to vector<8x128xf32>
    %12 = arith.mulf %11, %8 : vector<8x128xf32>
    %13 = arith.mulf %12, %8 : vector<8x128xf32>
    %14 = arith.mulf %13, %8 : vector<8x128xf32>
    %15 = arith.addf %8, %14 : vector<8x128xf32>
    %cst_8 = arith.constant 0.797884583 : f32
    %16 = vector.broadcast %cst_8 : f32 to vector<8x128xf32>
    %17 = arith.mulf %16, %15 : vector<8x128xf32>
    %18 = math.tanh %17 : vector<8x128xf32>
    %cst_9 = arith.constant 1.000000e+00 : f32
    %19 = vector.broadcast %cst_9 : f32 to vector<8x128xf32>
    %20 = arith.addf %19, %18 : vector<8x128xf32>
    %21 = arith.mulf %10, %20 : vector<8x128xf32>
    %c0_10 = arith.constant 0 : index
    %c0_11 = arith.constant 0 : index
    %22 = vector.load %arg8[%c0_10, %c0_11] : memref<8x32xf32, #tpu.memory_space<vmem>>, vector<8x32xf32>
    %c0_12 = arith.constant 0 : index
    %c0_13 = arith.constant 0 : index
    %23 = vector.load %arg5[%c0_12, %c0_13] : memref<128x32xf32, #tpu.memory_space<vmem>>, vector<128x32xf32>
    %cst_14 = arith.constant dense<0.000000e+00> : vector<8x32xf32>
    %24 = tpu.matmul %21, %23, %cst_14 {dimension_numbers = #tpu.dot_dimension_numbers<[1], [0], [0], [1], [0, 0, 1, 1], [], []>} : vector<8x128xf32>, vector<128x32xf32>, vector<8x32xf32> -> vector<8x32xf32>
    %25 = arith.addf %22, %24 : vector<8x32xf32>
    %c0_15 = arith.constant 0 : index
    %c0_16 = arith.constant 0 : index
    %26 = vector.load %arg8[%c0_15, %c0_16] : memref<8x32xf32, #tpu.memory_space<vmem>>, vector<8x32xf32>
    tpu.vector_store %arg8[%c0_15, %c0_16], %25 {strides = array<i32>} : memref<8x32xf32, #tpu.memory_space<vmem>>, vector<8x32xf32>,
    %c0_i32_17 = arith.constant 0 : i32
    %27 = arith.cmpi eq, %arg1, %c0_i32_17 : i32
    %28 = arith.extui %27 : i1 to i32
    %c0_i32_18 = arith.constant 0 : i32
    %29 = arith.cmpi ne, %28, %c0_i32_18 : i32
    scf.if %29 {
      %c0_19 = arith.constant 0 : index
      %c0_20 = arith.constant 0 : index
      %30 = vector.load %arg8[%c0_19, %c0_20] : memref<8x32xf32, #tpu.memory_space<vmem>>, vector<8x32xf32>
      %c0_21 = arith.constant 0 : index
      %c0_22 = arith.constant 0 : index
      %31 = vector.load %arg7[%c0_21, %c0_22] : memref<8x32xf32, #tpu.memory_space<vmem>>, vector<8x32xf32>
      tpu.vector_store %arg7[%c0_21, %c0_22], %30 {strides = array<i32>} : memref<8x32xf32, #tpu.memory_space<vmem>>, vector<8x32xf32>,
    } else {
    }
    return
  }
  func.func @transform_0(%arg0: i32, %arg1: i32) -> (i32, i32) {
    %c0_i32 = arith.constant 0 : i32
    %c0_i32_0 = arith.constant 0 : i32
    return %arg0, %c0_i32 : i32, i32
  }
  func.func @transform_1(%arg0: i32, %arg1: i32) -> (i32, i32) {
    %c0_i32 = arith.constant 0 : i32
    %c0_i32_0 = arith.constant 0 : i32
    return %c0_i32, %arg1 : i32, i32
  }
  func.func @transform_2(%arg0: i32, %arg1: i32) -> (i32, i32) {
    %c0_i32 = arith.constant 0 : i32
    %c0_i32_0 = arith.constant 0 : i32
    return %c0_i32, %arg1 : i32, i32
  }
  func.func @transform_3(%arg0: i32, %arg1: i32) -> (i32, i32) {
    %c0_i32 = arith.constant 0 : i32
    %c0_i32_0 = arith.constant 0 : i32
    return %arg1, %c0_i32 : i32, i32
  }
  func.func @transform_4(%arg0: i32, %arg1: i32) -> (i32, i32) {
    %c0_i32 = arith.constant 0 : i32
    %c0_i32_0 = arith.constant 0 : i32
    %c0_i32_1 = arith.constant 0 : i32
    return %c0_i32, %c0_i32_0 : i32, i32
  }
  func.func @transform_5(%arg0: i32, %arg1: i32) -> (i32, i32) {
    %c0_i32 = arith.constant 0 : i32
    %c0_i32_0 = arith.constant 0 : i32
    return %arg0, %c0_i32 : i32, i32
  }
}

</mosaic_0001>

<llo_original>
// kernel: tpu_custom_call.1
$region0: #{tpu_custom_call.1}
  #allocation0 [shape = 'u32[]', space=smem, size = 0x4, offset = 0x4, fixed_abs, tag = 'smem constant byte address 0x4 - core index']
  #allocation1 [shape = 'u32[144,128]{1,0:T(1,128)}', space=vmem, size = 0x12000, scoped, tag = 'internal scratch']
  #allocation2 [shape = 'f32[8,32]{1,0:T(8,128)}', space=vmem, size = 0x1000, scoped, tag = 'scratch operand']
  %s0 = inlined_call_operand.vmem [shape: f32[8,32], index: 0, kind: input, shape index: {}]
  %s1 = inlined_call_operand.vmem [shape: f32[32,128], index: 1, kind: input, shape index: {}]
  %s2 = inlined_call_operand.vmem [shape: f32[1,128], index: 2, kind: input, shape index: {}]
  %s3 = inlined_call_operand.vmem [shape: f32[128,32], index: 3, kind: input, shape index: {}]
  %s4 = inlined_call_operand.vmem [shape: f32[1,32], index: 4, kind: input, shape index: {}]
  %s5 = inlined_call_operand.hbm [shape: f32[8,32], index: 5, kind: output, shape index: {}]
  %s6 = sld [smem:[#allocation0]]
  $region38: #{tpu_custom_call.1} parent=0
    _
  %s8 = ssub.s32 1, %s6
  %s9 = scalar_select 0, %s8, %s6
  $region1: #{tpu_custom_call.1} parent=0
    #allocation3 [shape = 'u8[4096]{0}', space=vmem, size = 0x1000, scoped, tag = 'output window, operand 0, single buffered']
    #allocation4 [shape = 's32[1]{0}', space=sflag, size = 0x4, scoped, tag = 'scoped memory for tpu_custom_call.1']
    %10 = vsyncpa [#allocation4], 0
    // Predicated region
    $region2: #{tpu_custom_call.1} parent=1 // pred_check
      _
    $region3: #{tpu_custom_call.1} parent=1 // pred_check_branch
      %12 = sbr.rel (0) target = $region5
    $region4: #{tpu_custom_call.1} parent=1 // pred_region
      _
    $region5: #{tpu_custom_call.1} parent=1 // pred_fallthru
      _
    // Predicated region
    $region6: #{tpu_custom_call.1} parent=1 // pred_check
      _
    $region7: #{tpu_custom_call.1} parent=1 // pred_check_branch
      %14 = sbr.rel (0) target = $region9
    $region8: #{tpu_custom_call.1} parent=1 // pred_region
      _
    $region9: #{tpu_custom_call.1} parent=1 // pred_fallthru
      _
    // Predicated region
    $region10: #{tpu_custom_call.1} parent=1 // pred_check
      _
    $region11: #{tpu_custom_call.1} parent=1 // pred_check_branch
      %16 = sbr.rel (0) target = $region13
    $region12: #{tpu_custom_call.1} parent=1 // pred_region
      _
    $region13: #{tpu_custom_call.1} parent=1 // pred_fallthru
      _
    // Predicated region
    $region14: #{tpu_custom_call.1} parent=1 // pred_check
      _
    $region15: #{tpu_custom_call.1} parent=1 // pred_check_branch
      %18 = sbr.rel (0) target = $region17
    $region16: #{tpu_custom_call.1} parent=1 // pred_region
      _
    $region17: #{tpu_custom_call.1} parent=1 // pred_fallthru
      _
    // Predicated region
    $region18: #{tpu_custom_call.1} parent=1 // pred_check
      _
    $region19: #{tpu_custom_call.1} parent=1 // pred_check_branch
      %20 = sbr.rel (0) target = $region21
    $region20: #{tpu_custom_call.1} parent=1 // pred_region
      _
    $region21: #{tpu_custom_call.1} parent=1 // pred_fallthru
      _
    %p21 = scmp.eq.s32.totalorder 0, 0
    // Predicated region
    $region22: #{tpu_custom_call.1} parent=1 // pred_check
      %p22 = pneg %p21
    $region23: #{tpu_custom_call.1} parent=1 // pred_check_branch
      %24 = sbr.rel (%p22) target = $region25
    $region24: #{tpu_custom_call.1} parent=1 // pred_region
      %v25 = vld [vmem:[%s4] sm:$0x1]
      %v27 = vlaneseq
      %v28 = vshrl.u32 %v27, 7
      %v29 = vsub.s32 0, %v28
      %v30 = vrot.slane %v25, %v29
      %vm32 = vcmask 261120
      %33 = vst.msk [vmem:[#allocation2] sm:$0xff] %vm32, %v30
    $region25: #{tpu_custom_call.1} parent=1 // pred_fallthru
      _
    %v34 = vld [vmem:[%s0] sm:$0xff]
    %v35 = vld [vmem:[%s1] sm:$0xff]
    %v36 = vld [vmem:[%s1 + $0x8] sm:$0xff]
    %v37 = vld [vmem:[%s1 + $0x10] sm:$0xff]
    %v38 = vld [vmem:[%s1 + $0x18] sm:$0xff]
    %v39 = vld [vmem:[%s2] sm:$0x1]
    %v41 = vlaneseq
    %v42 = vshrl.u32 %v41, 7
    %v43 = vsub.s32 0, %v42
    %v44 = vrot.slane %v39, %v43
    %vm46 = vcmask 261120
    %v48 = vsel %vm46, %v34, 0
    %50 = vmatprep.subr.mxu0 0.0
    %51 = vmatpush1.msra.mxu0 %v35
    %52 = vmatprep.subr.mxu0 0.0
    %53 = vmatpush1.msra.mxu0 %v36
    %54 = vmatprep.subr.mxu0 0.0
    %55 = vmatpush1.msra.mxu0 %v37
    %56 = vmatprep.subr.mxu0 0.0
    %57 = vmatpush1.msra.mxu0 %v38
    %58 = vmatprep.subr.mxu0 0.0
    %59 = vmatpush1.msra.mxu0 0.0
    %60 = vmatprep.subr.mxu0 0.0
    %61 = vmatpush1.msra.mxu0 0.0
    %62 = vmatprep.subr.mxu0 0.0
    %63 = vmatpush1.msra.mxu0 0.0
    %64 = vmatprep.subr.mxu0 0.0
    %65 = vmatpush1.msra.mxu0 0.0
    %66 = vmatprep.subr.mxu0 0.0
    %67 = vmatpush1.msra.mxu0 0.0
    %68 = vmatprep.subr.mxu0 0.0
    %69 = vmatpush1.msra.mxu0 0.0
    %70 = vmatprep.subr.mxu0 0.0
    %71 = vmatpush1.msra.mxu0 0.0
    %72 = vmatprep.subr.mxu0 0.0
    %73 = vmatpush1.msra.mxu0 0.0
    %74 = vmatprep.subr.mxu0 0.0
    %75 = vmatpush1.msra.mxu0 0.0
    %76 = vmatprep.subr.mxu0 0.0
    %77 = vmatpush1.msra.mxu0 0.0
    %78 = vmatprep.subr.mxu0 0.0
    %79 = vmatpush1.msra.mxu0 0.0
    %80 = vmatprep.subr.mxu0 0.0
    %81 = vmatpush1.msra.mxu0 0.0
    %82 = vmatprep.subr.mxu0 0.0
    %83 = vmatpush1.msra.mxu0 0.0
    %84 = vmatprep.subr.mxu0 0.0
    %85 = vmatpush1.msra.mxu0 0.0
    %86 = vmatprep.subr.mxu0 0.0
    %87 = vmatpush1.msra.mxu0 0.0
    %88 = vmatprep.subr.mxu0 0.0
    %89 = vmatpush1.msra.mxu0 0.0
    %90 = vmatprep.subr.mxu0 0.0
    %91 = vmatpush1.msra.mxu0 0.0
    %92 = vmatprep.subr.mxu0 0.0
    %93 = vmatpush1.msra.mxu0 0.0
    %94 = vmatprep.subr.mxu0 0.0
    %95 = vmatpush1.msra.mxu0 0.0
    %96 = vmatprep.subr.mxu0 0.0
    %97 = vmatpush1.msra.mxu0 0.0
    %98 = vmatprep.subr.mxu0 0.0
    %99 = vmatpush1.msra.mxu0 0.0
    %100 = vmatprep.subr.mxu0 0.0
    %101 = vmatpush1.msra.mxu0 0.0
    %102 = vmatprep.subr.mxu0 0.0
    %103 = vmatpush1.msra.mxu0 0.0
    %104 = vmatprep.subr.mxu0 0.0
    %105 = vmatpush1.msra.mxu0 0.0
    %106 = vmatprep.subr.mxu0 0.0
    %107 = vmatpush1.msra.mxu0 0.0
    %108 = vmatprep.subr.mxu0 0.0
    %109 = vmatpush1.msra.mxu0 0.0
    %110 = vmatprep.subr.mxu0 0.0
    %111 = vmatpush1.msra.mxu0 0.0
    %112 = vmatprep.subr.mxu0 0.0
    %113 = vmatpush1.msra.mxu0 0.0
    %114 = vmatprep.mubr.f32.mxu0 0.0
    %115 = vmatmul.mubr.f32.gmra.mrb[0].mxu0 %v48
    %v116 = vpop.f32.mrb[0].mxu0
    %v117 = vadd.f32 %v44, %v116
    %v118 = vpop.f32.mrb[0].mxu0
    %119 = vdwg.mxu0
    %v120 = vmul.f32 %v117, 0.5
    %v121 = vmul.f32 %v117, 0.044715
    %v122 = vmul.f32 %v121, %v117
    %v123 = vmul.f32 %v122, %v117
    %v124 = vadd.f32 %v117, %v123
    %v125 = vmul.f32 %v124, 0.7978846
    %v126 = vtanh.pop %v125
    %v127 = vadd.f32 %v126, 1.0
    %v128 = vmul.f32 %v120, %v127
    %v129 = vld [vmem:[#allocation2] sm:$0xff]
    %v130 = vld [vmem:[%s3] sm:$0xff]
    %v131 = vld [vmem:[%s3 + $0x8] sm:$0xff]
    %v132 = vld [vmem:[%s3 + $0x10] sm:$0xff]
    %v133 = vld [vmem:[%s3 + $0x18] sm:$0xff]
    %v134 = vld [vmem:[%s3 + $0x20] sm:$0xff]
    %v135 = vld [vmem:[%s3 + $0x28] sm:$0xff]
    %v136 = vld [vmem:[%s3 + $0x30] sm:$0xff]
    %v137 = vld [vmem:[%s3 + $0x38] sm:$0xff]
    %v138 = vld [vmem:[%s3 + $0x40] sm:$0xff]
    %v139 = vld [vmem:[%s3 + $0x48] sm:$0xff]
    %v140 = vld [vmem:[%s3 + $0x50] sm:$0xff]
    %v141 = vld [vmem:[%s3 + $0x58] sm:$0xff]
    %v142 = vld [vmem:[%s3 + $0x60] sm:$0xff]
    %v143 = vld [vmem:[%s3 + $0x68] sm:$0xff]
    %v144 = vld [vmem:[%s3 + $0x70] sm:$0xff]
    %v145 = vld [vmem:[%s3 + $0x78] sm:$0xff]
    %146 = vmatprep.subr.mxu0 0.0
    %147 = vmatpush1.msra.mxu0 %v130
    %148 = vmatprep.subr.mxu0 0.0
    %149 = vmatpush1.msra.mxu0 %v131
    %150 = vmatprep.subr.mxu0 0.0
    %151 = vmatpush1.msra.mxu0 %v132
    %152 = vmatprep.subr.mxu0 0.0
    %153 = vmatpush1.msra.mxu0 %v133
    %154 = vmatprep.subr.mxu0 0.0
    %155 = vmatpush1.msra.mxu0 %v134
    %156 = vmatprep.subr.mxu0 0.0
    %157 = vmatpush1.msra.mxu0 %v135
    %158 = vmatprep.subr.mxu0 0.0
    %159 = vmatpush1.msra.mxu0 %v136
    %160 = vmatprep.subr.mxu0 0.0
    %161 = vmatpush1.msra.mxu0 %v137
    %162 = vmatprep.subr.mxu0 0.0
    %163 = vmatpush1.msra.mxu0 %v138
    %164 = vmatprep.subr.mxu0 0.0
    %165 = vmatpush1.msra.mxu0 %v139
    %166 = vmatprep.subr.mxu0 0.0
    %167 = vmatpush1.msra.mxu0 %v140
    %168 = vmatprep.subr.mxu0 0.0
    %169 = vmatpush1.msra.mxu0 %v141
    %170 = vmatprep.subr.mxu0 0.0
    %171 = vmatpush1.msra.mxu0 %v142
    %172 = vmatprep.subr.mxu0 0.0
    %173 = vmatpush1.msra.mxu0 %v143
    %174 = vmatprep.subr.mxu0 0.0
    %175 = vmatpush1.msra.mxu0 %v144
    %176 = vmatprep.subr.mxu0 0.0
    %177 = vmatpush1.msra.mxu0 %v145
    %178 = vmatprep.subr.mxu0 0.0
    %179 = vmatpush1.msra.mxu0 0.0
    %180 = vmatprep.subr.mxu0 0.0
    %181 = vmatpush1.msra.mxu0 0.0
    %182 = vmatprep.subr.mxu0 0.0
    %183 = vmatpush1.msra.mxu0 0.0
    %184 = vmatprep.subr.mxu0 0.0
    %185 = vmatpush1.msra.mxu0 0.0
    %186 = vmatprep.subr.mxu0 0.0
    %187 = vmatpush1.msra.mxu0 0.0
    %188 = vmatprep.subr.mxu0 0.0
    %189 = vmatpush1.msra.mxu0 0.0
    %190 = vmatprep.subr.mxu0 0.0
    %191 = vmatpush1.msra.mxu0 0.0
    %192 = vmatprep.subr.mxu0 0.0
    %193 = vmatpush1.msra.mxu0 0.0
    %194 = vmatprep.subr.mxu0 0.0
    %195 = vmatpush1.msra.mxu0 0.0
    %196 = vmatprep.subr.mxu0 0.0
    %197 = vmatpush1.msra.mxu0 0.0
    %198 = vmatprep.subr.mxu0 0.0
    %199 = vmatpush1.msra.mxu0 0.0
    %200 = vmatprep.subr.mxu0 0.0
    %201 = vmatpush1.msra.mxu0 0.0
    %202 = vmatprep.subr.mxu0 0.0
    %203 = vmatpush1.msra.mxu0 0.0
    %204 = vmatprep.subr.mxu0 0.0
    %205 = vmatpush1.msra.mxu0 0.0
    %206 = vmatprep.subr.mxu0 0.0
    %207 = vmatpush1.msra.mxu0 0.0
    %208 = vmatprep.subr.mxu0 0.0
    %209 = vmatpush1.msra.mxu0 0.0
    %210 = vmatprep.mubr.f32.mxu0 0.0
    %211 = vmatmul.mubr.f32.gmra.mrb[0].mxu0 %v128
    %v212 = vpop.f32.mrb[0].mxu0
    %v213 = vadd.f32 0.0, %v212
    %v214 = vpop.f32.mrb[0].mxu0
    %215 = vdwg.mxu0
    %v216 = vadd.f32 %v129, %v213
    %217 = vst.msk [vmem:[#allocation2] sm:$0xff] %vm46, %v216
    // Predicated region
    $region26: #{tpu_custom_call.1} parent=1 // pred_check
      %p218 = pneg %p21
    $region27: #{tpu_custom_call.1} parent=1 // pred_check_branch
      %220 = sbr.rel (%p218) target = $region29
    $region28: #{tpu_custom_call.1} parent=1 // pred_region
      %v221 = vld [vmem:[#allocation2] sm:$0xff]
      %222 = vst.msk [vmem:[#allocation3] sm:$0xff] %vm46, %v221
    $region29: #{tpu_custom_call.1} parent=1 // pred_fallthru
      _
    // Predicated region
    $region30: #{tpu_custom_call.1} parent=1 // pred_check
      _
    $region31: #{tpu_custom_call.1} parent=1 // pred_check_branch
      %224 = sbr.rel (0) target = $region33
    $region32: #{tpu_custom_call.1} parent=1 // pred_region
      %s226 = ssub.s32 128, 128
      %227 = vsyncadd [#allocation4], %s226
      %s229 = sshll.u32 [#allocation3], 4
      %s230 = int_to_ptr.vmem [resolvable:$true] %s229
      %232 = dma.vmem_to_hbm [thread:$0]  %s230, 128, %s5, [#allocation4]
    $region33: #{tpu_custom_call.1} parent=1 // pred_fallthru
      _
    // Predicated region
    $region34: #{tpu_custom_call.1} parent=1 // pred_check
      _
    $region35: #{tpu_custom_call.1} parent=1 // pred_check_branch
      %234 = sbr.rel (0) target = $region37
    $region36: #{tpu_custom_call.1} parent=1 // pred_region
      %235 = dma.done [#allocation4], 128
    $region37: #{tpu_custom_call.1} parent=1 // pred_fallthru
      _
    %236 = vsyncpa [#allocation4], 1

</llo_original>
